<compile_context>
chip_gen: v6e
topology: v6e:2x2x1
jax: 0.10.0
libtpu: 0.0.40
codegen_flags: <defaults>
</compile_context>

<pallas_src>
import jax
import jax.numpy as jnp
from jax.experimental import pallas as pl
from jax.experimental.pallas import tpu as pltpu


# ---------------------------------------------------------------------------
# Kernels: x_ref is (C_t, HW_t); gamma/beta refs are (1, HW_t) and broadcast
# over the channel (sublane) axis inside the kernel.
# ---------------------------------------------------------------------------
def _ms_both_kernel(x_ref, g_ref, b_ref, o_ref):
    o_ref[...] = (x_ref[...] * g_ref[...] + b_ref[...]).astype(o_ref.dtype)


def _ms_mul_kernel(x_ref, g_ref, o_ref):
    o_ref[...] = (x_ref[...] * g_ref[...]).astype(o_ref.dtype)


def _ms_add_kernel(x_ref, b_ref, o_ref):
    o_ref[...] = (x_ref[...] + b_ref[...]).astype(o_ref.dtype)


# ---------------------------------------------------------------------------
# Tiling helpers
# ---------------------------------------------------------------------------
_TARGET_LANES = 2048       # 512-2048 lane-wide tiles ~ HBM roofline for mem-bound ops
_FALLBACK_HW_TILE = 1024   # lane-dense tile when HW has no multiple-of-128 divisor


def _chip_params():
    """Return (target x-block bytes, scoped VMEM limit) tuned per TPU generation."""
    try:
        vmem = int(pltpu.get_tpu_info().vmem_capacity_bytes)
    except Exception:
        vmem = 128 << 20
    if vmem <= (64 << 20):
        # v7x-class: 64 MiB VMEM but ~3.2 TB/s HBM -> bigger blocks to amortize
        # the ~0.35us per-grid-step overhead; 2*(in+out) at 6 MiB = 24 MiB.
        return 6 << 20, 44 << 20
    # v5e / v6e class (128 MiB physical VMEM): 4 MiB blocks, explicit 48 MiB scope.
    return 4 << 20, 48 << 20


def _sublane_base(itemsize):
    # f32 -> 8-row sublane tile, bf16 -> 16 (2 rows packed/sublane), int8/fp8 -> 32.
    return {4: 8, 2: 16, 1: 32}.get(int(itemsize), 8)


def _largest_divisor_multiple(dim, base, cap):
    """Largest d with d % base == 0, d | dim and d <= cap; None if none exists."""
    cap = min(cap, dim)
    d = (cap // base) * base
    while d >= base:
        if dim % d == 0:
            return d
        d -= base
    return None


def _pick_tiles(C, HW, itemsize, target_block_bytes):
    # Lane (spatial) tile: full extent when small (always layout-legal), else a
    # multiple-of-128 divisor of HW; else a lane-dense non-divisor tile whose
    # last block is masked via a cdiv'd grid.
    if HW <= _TARGET_LANES:
        hw_t = HW
    else:
        hw_t = _largest_divisor_multiple(HW, 128, _TARGET_LANES) or _FALLBACK_HW_TILE

    # Sublane (channel) tile: multiple of the dtype's packed-row base, capped so
    # the x block stays within the per-generation budget. Non-divisor c_t is
    # allowed (edge block masked) so awkward channel counts never blow VMEM.
    base = _sublane_base(itemsize)
    budget_rows = max(base, (target_block_bytes // (hw_t * itemsize)) // base * base)
    if C <= budget_rows:
        c_t = C  # full-dim block is always legal
    else:
        c_t = _largest_divisor_multiple(C, base, budget_rows) or budget_rows
    return c_t, hw_t


# ---------------------------------------------------------------------------
# Forward
# ---------------------------------------------------------------------------
def ms_forward(x, beta=None, gamma=None, *, donate_x=False):
    """Pallas implementation of MS.forward.

    x:     (N, C, H, W)
    beta:  (N, 1, H, W) or None
    gamma: (N, 1, H, W) or None
    donate_x: set True only when the caller actually donates x's buffer (e.g.
              via jax.jit donate_argnums); aliasing a live input makes XLA
              insert a defensive copy and doubles HBM traffic.
    Returns x * gamma + beta (skipping either term when None).
    """
    if beta is None and gamma is None:
        return x

    N, C, H, W = x.shape
    HW = H * W
    itemsize = jnp.dtype(x.dtype).itemsize
    target_block_bytes, vmem_limit = _chip_params()
    c_t, hw_t = _pick_tiles(C, HW, itemsize, target_block_bytes)

    # C-tiles innermost: gamma/beta's block index (n, 0, s) is constant across
    # consecutive grid steps, so Pallas keeps the stats tile resident in VMEM.
    grid = (N, pl.cdiv(HW, hw_t), pl.cdiv(C, c_t))

    x3 = x.reshape(N, C, HW)

    # Leading (batch) block dim is squeezed so the kernel sees clean 2D refs.
    x_spec = pl.BlockSpec((pl.Squeezed(), c_t, hw_t), lambda n, s, c: (n, c, s))
    s_spec = pl.BlockSpec((pl.Squeezed(), 1, hw_t), lambda n, s, c: (n, 0, s))

    inputs = [x3]
    in_specs = [x_spec]
    if gamma is not None:
        inputs.append(gamma.reshape(N, 1, HW))
        in_specs.append(s_spec)
    if beta is not None:
        inputs.append(beta.reshape(N, 1, HW))
        in_specs.append(s_spec)

    if gamma is not None and beta is not None:
        kernel = _ms_both_kernel
    elif gamma is not None:
        kernel = _ms_mul_kernel
    else:
        kernel = _ms_add_kernel

    out = pl.pallas_call(
        kernel,
        out_shape=jax.ShapeDtypeStruct((N, C, HW), x.dtype),
        grid=grid,
        in_specs=in_specs,
        out_specs=x_spec,
        input_output_aliases=({0: 0} if donate_x else {}),
        compiler_params=pltpu.CompilerParams(
            dimension_semantics=("parallel", "parallel", "parallel"),
            vmem_limit_bytes=vmem_limit),
    )(*inputs)

    return out.reshape(N, C, H, W)


class MS:
    """Mirror of the PyTorch MS module (functional, no user-visible mutation)."""

    def __init__(self, beta=None, gamma=None):
        self.gamma, self.beta = gamma, beta

    def __call__(self, x, beta=None, gamma=None):
        beta = self.beta if beta is None else beta
        gamma = self.gamma if gamma is None else gamma
        return ms_forward(x, beta=beta, gamma=gamma)


if __name__ == "__main__":
    key = jax.random.PRNGKey(0)
    kx, kb, kg = jax.random.split(key, 3)

    # Small, module-consistent shapes: (N, C, H, W) activations with PONO
    # per-sample/per-location statistics broadcast over channels.
    N, C, H, W = 2, 4, 16, 16
    x = jax.random.normal(kx, (N, C, H, W), dtype=jnp.float32)
    beta = jax.random.normal(kb, (N, 1, H, W), dtype=jnp.float32)
    gamma = jax.random.normal(kg, (N, 1, H, W), dtype=jnp.float32) + 1.0

    ms = MS()
    out = jax.block_until_ready(ms(x, beta=beta, gamma=gamma))
    ref = x * gamma + beta
    assert jnp.allclose(out, ref, atol=1e-6), "mismatch vs reference"

    # Exercise the None paths.
    out_g = jax.block_until_ready(ms(x, gamma=gamma))
    assert jnp.allclose(out_g, x * gamma, atol=1e-6)
    out_b = jax.block_until_ready(ms(x, beta=beta))
    assert jnp.allclose(out_b, x + beta, atol=1e-6)
    out_none = jax.block_until_ready(ms(x))
    assert jnp.allclose(out_none, x)

    # Awkward (non-128 / non-8 aligned) shape to exercise full-dim blocks.
    N2, C2, H2, W2 = 1, 5, 10, 13
    x2 = jax.random.normal(kx, (N2, C2, H2, W2), dtype=jnp.float32)
    b2 = jax.random.normal(kb, (N2, 1, H2, W2), dtype=jnp.float32)
    g2 = jax.random.normal(kg, (N2, 1, H2, W2), dtype=jnp.float32) + 1.0
    out2 = jax.block_until_ready(ms(x2, beta=b2, gamma=g2))
    assert jnp.allclose(out2, x2 * g2 + b2, atol=1e-6)

    # Donated-buffer path (in-place style).
    out3 = jax.block_until_ready(
        ms_forward(x, beta=beta, gamma=gamma, donate_x=True))
    assert jnp.allclose(out3, ref, atol=1e-6)

    print("KERNEL_OK")
</pallas_src>

<mosaic_0001>
module attributes {stable_mosaic.version = 11 : i64} {
  func.func @_ms_both_kernel(%arg0: i32, %arg1: i32, %arg2: i32, %arg3: memref<1x4x256xf32, #tpu.memory_space<vmem>>, %arg4: memref<1x1x256xf32, #tpu.memory_space<vmem>>, %arg5: memref<1x1x256xf32, #tpu.memory_space<vmem>>, %arg6: memref<1x4x256xf32, #tpu.memory_space<vmem>>) attributes {dimension_semantics = [#tpu.dimension_semantics<parallel>, #tpu.dimension_semantics<parallel>, #tpu.dimension_semantics<parallel>], iteration_bounds = array<i64: 2, 1, 1>, scalar_prefetch = 0 : i64, scratch_operands = 0 : i64, tpu.core_type = #tpu.core_type<tc>, window_params = [{transform_indices = @transform_0, window_bounds = array<i64: 1, 4, 256>}, {transform_indices = @transform_1, window_bounds = array<i64: 1, 1, 256>}, {transform_indices = @transform_2, window_bounds = array<i64: 1, 1, 256>}, {transform_indices = @transform_3, window_bounds = array<i64: 1, 4, 256>}]} {
    %c0 = arith.constant 0 : index
    %c0_0 = arith.constant 0 : index
    %c0_1 = arith.constant 0 : index
    %0 = vector.load %arg3[%c0, %c0_0, %c0_1] : memref<1x4x256xf32, #tpu.memory_space<vmem>>, vector<1x4x256xf32>
    %1 = vector.shape_cast %0 : vector<1x4x256xf32> to vector<4x256xf32>
    %c0_2 = arith.constant 0 : index
    %c0_3 = arith.constant 0 : index
    %c0_4 = arith.constant 0 : index
    %2 = vector.load %arg4[%c0_2, %c0_3, %c0_4] : memref<1x1x256xf32, #tpu.memory_space<vmem>>, vector<1x1x256xf32>
    %3 = vector.shape_cast %2 : vector<1x1x256xf32> to vector<1x256xf32>
    %4 = vector.broadcast %3 : vector<1x256xf32> to vector<4x256xf32>
    %5 = arith.mulf %1, %4 : vector<4x256xf32>
    %c0_5 = arith.constant 0 : index
    %c0_6 = arith.constant 0 : index
    %c0_7 = arith.constant 0 : index
    %6 = vector.load %arg5[%c0_5, %c0_6, %c0_7] : memref<1x1x256xf32, #tpu.memory_space<vmem>>, vector<1x1x256xf32>
    %7 = vector.shape_cast %6 : vector<1x1x256xf32> to vector<1x256xf32>
    %8 = vector.broadcast %7 : vector<1x256xf32> to vector<4x256xf32>
    %9 = arith.addf %5, %8 : vector<4x256xf32>
    %c0_8 = arith.constant 0 : index
    %c0_9 = arith.constant 0 : index
    %c0_10 = arith.constant 0 : index
    %10 = vector.load %arg6[%c0_8, %c0_9, %c0_10] : memref<1x4x256xf32, #tpu.memory_space<vmem>>, vector<1x4x256xf32>
    %11 = vector.shape_cast %10 : vector<1x4x256xf32> to vector<4x256xf32>
    %12 = vector.shape_cast %9 : vector<4x256xf32> to vector<1x4x256xf32>
    tpu.vector_store %arg6[%c0_8, %c0_9, %c0_10], %12 {strides = array<i32>} : memref<1x4x256xf32, #tpu.memory_space<vmem>>, vector<1x4x256xf32>,
    return
  }
  func.func @transform_0(%arg0: i32, %arg1: i32, %arg2: i32) -> (i32, i32, i32) {
    %c0_i32 = arith.constant 0 : i32
    return %arg0, %arg2, %arg1 : i32, i32, i32
  }
  func.func @transform_1(%arg0: i32, %arg1: i32, %arg2: i32) -> (i32, i32, i32) {
    %c0_i32 = arith.constant 0 : i32
    %c0_i32_0 = arith.constant 0 : i32
    return %arg0, %c0_i32, %arg1 : i32, i32, i32
  }
  func.func @transform_2(%arg0: i32, %arg1: i32, %arg2: i32) -> (i32, i32, i32) {
    %c0_i32 = arith.constant 0 : i32
    %c0_i32_0 = arith.constant 0 : i32
    return %arg0, %c0_i32, %arg1 : i32, i32, i32
  }
  func.func @transform_3(%arg0: i32, %arg1: i32, %arg2: i32) -> (i32, i32, i32) {
    %c0_i32 = arith.constant 0 : i32
    return %arg0, %arg2, %arg1 : i32, i32, i32
  }
}

</mosaic_0001>

<llo_original>
// kernel: tpu_custom_call.1
$region0: #{tpu_custom_call.1}
  #allocation0 [shape = 'u32[]', space=smem, size = 0x4, offset = 0x4, fixed_abs, tag = 'smem constant byte address 0x4 - core index']
  #allocation1 [shape = 'u32[144,128]{1,0:T(1,128)}', space=vmem, size = 0x12000, scoped, tag = 'internal scratch']
  %s0 = inlined_call_operand.hbm [shape: f32[2,4,256], index: 0, kind: input, shape index: {}]
  %s1 = inlined_call_operand.hbm [shape: f32[2,1,256], index: 1, kind: input, shape index: {}]
  %s2 = inlined_call_operand.hbm [shape: f32[2,1,256], index: 2, kind: input, shape index: {}]
  %s3 = inlined_call_operand.hbm [shape: f32[2,4,256], index: 3, kind: output, shape index: {}]
  %s4 = sld [smem:[#allocation0]]
  $region57: #{tpu_custom_call.1} parent=0
    _
  %s6 = ssub.s32 1, %s4
  %s7 = scalar_select 0, %s6, %s4
  $region1: #{tpu_custom_call.1} parent=0
    #allocation2 [shape = 'u8[8192]{0}', space=vmem, size = 0x2000, scoped, tag = 'input window, operand 0']
    #allocation3 [shape = 's32[2]{0}', space=sflag, size = 0x8, scoped, tag = 'scoped memory for tpu_custom_call.1']
    #allocation4 [shape = 's32[2]{0}', space=sflag, size = 0x8, scoped, tag = 'scoped memory for tpu_custom_call.1']
    #allocation5 [shape = 'u8[2048]{0}', space=vmem, size = 0x800, scoped, tag = 'input window, operand 1']
    #allocation6 [shape = 's32[2]{0}', space=sflag, size = 0x8, scoped, tag = 'scoped memory for tpu_custom_call.1']
    #allocation7 [shape = 'u8[2048]{0}', space=vmem, size = 0x800, scoped, tag = 'input window, operand 2']
    #allocation8 [shape = 'u8[8192]{0}', space=vmem, size = 0x2000, scoped, tag = 'output window, operand 0']
    %8 = vsyncpa [#allocation3], 0
    %s9 = scalar_lea.sflag [#allocation3], 1
    %10 = vsyncpa %s9, 0
    %11 = vsyncpa [#allocation6], 0
    %s12 = scalar_lea.sflag [#allocation6], 1
    %13 = vsyncpa %s12, 0
    %14 = vsyncpa [#allocation4], 0
    %s15 = scalar_lea.sflag [#allocation4], 1
    %16 = vsyncpa %s15, 0
    loop: start=0, step=1, limit=4
    $region2: #{tpu_custom_call.1} parent=1 // loop_pre_header
      _
    $region3: #{tpu_custom_call.1} parent=1 // loop_header
      %s18 = sphi 0, %s22
      %p19 = scmp.ge.s32.totalorder %s18, 4
      %s25 = sphi 0, %s44
      %s26 = sphi 0, %s40
      %s27 = sphi 0, %s36
      %s28 = sphi 0, %s25
      %s29 = sphi 0, %s26
      %s30 = sphi 0, %s27
      %s31 = sphi 0, %s28
      %s32 = sphi 0, %s29
      %s33 = sphi 0, %s30
      %s51 = sphi 0, %s53
      %s54 = sphi 0, %s51
      %s55 = sphi 0, %s54
      %s71 = sphi 0, %s55
      %s79 = sphi 0, %s81
      %s82 = sphi 0, %s79
      %s83 = sphi 0, %s82
      %s99 = sphi 0, %s83
      %s107 = sphi 0, %s109
      %s110 = sphi 0, %s107
      %s111 = sphi 0, %s110
      %s127 = sphi 0, %s111
      %s137 = sphi 0, %s139
      %s140 = sphi 0, %s137
      %s141 = sphi 0, %s140
      %s157 = sphi 0, %s141
    $region4: #{tpu_custom_call.1} parent=1 // loop_header_branch
      %21 = sbr.rel (%p19) target = $region8
    $region5: #{tpu_custom_call.1} parent=1 // loop_body
      %s23 = ssub.s32 %s18, 1
      %s24 = ssub.s32 %s18, 2
      %s34 = sadd.s32 1, %s27
      %p35 = scmp.ge.s32.totalorder %s34, 1
      %s36 = scalar_select %p35, 0, %s34
      %s37 = sadd.s32 1, %s26
      %s38 = scalar_select %p35, %s37, %s26
      %p39 = scmp.ge.s32.totalorder %s38, 1
      %s40 = scalar_select %p39, 0, %s38
      %s41 = sadd.s32 1, %s25
      %s42 = scalar_select %p39, %s41, %s25
      %p43 = scmp.ge.s32.totalorder %s42, 2
      %s44 = scalar_select %p43, 0, %s42
      %s45 = ssub.s32 %s25, %s44
      %s46 = ssub.s32 %s27, %s36
      %s47 = sor.u32 %s45, %s46
      %s48 = ssub.s32 %s26, %s40
      %s49 = sor.u32 %s47, %s48
      %p50 = scmp.eq.s32.totalorder %s49, 0
      %s52 = sadd.s32 %s51, 1
      %s53 = scalar_select %p50, %s51, %s52
      %p56 = pneg %p50
      %p57 = scmp.eq.s32.totalorder %s18, 1
      %p58 = por %p56, %p57
      %p59 = scmp.ne.s32.totalorder %s51, %s54
      %p60 = scmp.eq.s32.totalorder %s18, 0
      %p61 = por %p59, %p60
      %p62 = scmp.ne.s32.totalorder %s51, %s54
      %p63 = scmp.eq.s32.totalorder %s23, 1
      %p64 = por %p62, %p63
      %p65 = scmp.ne.s32.totalorder %s54, %s55
      %p66 = scmp.eq.s32.totalorder %s23, 0
      %p67 = por %p65, %p66
      %p68 = scmp.ne.s32.totalorder %s54, %s55
      %p69 = scmp.eq.s32.totalorder %s24, 1
      %p70 = por %p68, %p69
      %p72 = scmp.ne.s32.totalorder %s55, %s71
      %p73 = scmp.eq.s32.totalorder %s24, 0
      %p74 = por %p72, %p73
      %s75 = ssub.s32 %s25, %s44
      %s76 = ssub.s32 %s26, %s40
      %s77 = sor.u32 %s75, %s76
      %p78 = scmp.eq.s32.totalorder %s77, 0
      %s80 = sadd.s32 %s79, 1
      %s81 = scalar_select %p78, %s79, %s80
      %p84 = pneg %p78
      %p85 = scmp.eq.s32.totalorder %s18, 1
      %p86 = por %p84, %p85
      %p87 = scmp.ne.s32.totalorder %s79, %s82
      %p88 = scmp.eq.s32.totalorder %s18, 0
      %p89 = por %p87, %p88
      %p90 = scmp.ne.s32.totalorder %s79, %s82
      %p91 = scmp.eq.s32.totalorder %s23, 1
      %p92 = por %p90, %p91
      %p93 = scmp.ne.s32.totalorder %s82, %s83
      %p94 = scmp.eq.s32.totalorder %s23, 0
      %p95 = por %p93, %p94
      %p96 = scmp.ne.s32.totalorder %s82, %s83
      %p97 = scmp.eq.s32.totalorder %s24, 1
      %p98 = por %p96, %p97
      %p100 = scmp.ne.s32.totalorder %s83, %s99
      %p101 = scmp.eq.s32.totalorder %s24, 0
      %p102 = por %p100, %p101
      %s103 = ssub.s32 %s25, %s44
      %s104 = ssub.s32 %s26, %s40
      %s105 = sor.u32 %s103, %s104
      %p106 = scmp.eq.s32.totalorder %s105, 0
      %s108 = sadd.s32 %s107, 1
      %s109 = scalar_select %p106, %s107, %s108
      %p112 = pneg %p106
      %p113 = scmp.eq.s32.totalorder %s18, 1
      %p114 = por %p112, %p113
      %p115 = scmp.ne.s32.totalorder %s107, %s110
      %p116 = scmp.eq.s32.totalorder %s18, 0
      %p117 = por %p115, %p116
      %p118 = scmp.ne.s32.totalorder %s107, %s110
      %p119 = scmp.eq.s32.totalorder %s23, 1
      %p120 = por %p118, %p119
      %p121 = scmp.ne.s32.totalorder %s110, %s111
      %p122 = scmp.eq.s32.totalorder %s23, 0
      %p123 = por %p121, %p122
      %p124 = scmp.ne.s32.totalorder %s110, %s111
      %p125 = scmp.eq.s32.totalorder %s24, 1
      %p126 = por %p124, %p125
      %p128 = scmp.ne.s32.totalorder %s111, %s127
      %p129 = scmp.eq.s32.totalorder %s24, 0
      %p130 = por %p128, %p129
      %s131 = ssub.s32 %s25, %s44
      %s132 = ssub.s32 %s27, %s36
      %s133 = sor.u32 %s131, %s132
      %s134 = ssub.s32 %s26, %s40
      %s135 = sor.u32 %s133, %s134
      %p136 = scmp.eq.s32.totalorder %s135, 0
      %s138 = sadd.s32 %s137, 1
      %s139 = scalar_select %p136, %s137, %s138
      %p142 = pneg %p136
      %p143 = scmp.eq.s32.totalorder %s18, 1
      %p144 = por %p142, %p143
      %p145 = scmp.ne.s32.totalorder %s137, %s140
      %p146 = scmp.eq.s32.totalorder %s18, 0
      %p147 = por %p145, %p146
      %p148 = scmp.ne.s32.totalorder %s137, %s140
      %p149 = scmp.eq.s32.totalorder %s23, 1
      %p150 = por %p148, %p149
      %p151 = scmp.ne.s32.totalorder %s140, %s141
      %p152 = scmp.eq.s32.totalorder %s23, 0
      %p153 = por %p151, %p152
      %p154 = scmp.ne.s32.totalorder %s140, %s141
      %p155 = scmp.eq.s32.totalorder %s24, 1
      %p156 = por %p154, %p155
      %p158 = scmp.ne.s32.totalorder %s141, %s157
      %p159 = scmp.eq.s32.totalorder %s24, 0
      %p160 = por %p158, %p159
      %p161 = scmp.le.s32.totalorder 1, %s18
      %p162 = scmp.lt.s32.totalorder %s18, 3
      %p163 = pnand %p161, %p162
      %p164 = pneg %p163
      // Predicated region
      $region9: #{tpu_custom_call.1} parent=5 // pred_check
        _
      $region10: #{tpu_custom_call.1} parent=5 // pred_check_branch
        %166 = sbr.rel (%p163) target = $region12
      $region11: #{tpu_custom_call.1} parent=5 // pred_region
        %s167 = ssub.s32 %s18, 1
      $region12: #{tpu_custom_call.1} parent=5 // pred_fallthru
        _
      %p168 = scmp.lt.s32.totalorder %s18, 2
      // Predicated region
      $region13: #{tpu_custom_call.1} parent=5 // pred_check
        %p169 = pneg %p168
      $region14: #{tpu_custom_call.1} parent=5 // pred_check_branch
        %171 = sbr.rel (%p169) target = $region16
      $region15: #{tpu_custom_call.1} parent=5 // pred_region
        // Predicated region
        $region17: #{tpu_custom_call.1} parent=15 // pred_check
          %p172 = pneg %p61
        $region18: #{tpu_custom_call.1} parent=15 // pred_check_branch
          %174 = sbr.rel (%p172) target = $region20
        $region19: #{tpu_custom_call.1} parent=15 // pred_region
          %s175 = sand.u32 %s51, 1
          %s176 = scalar_lea.sflag [#allocation3], %s175
          %s177 = sand.u32 %s51, 1
          %s178 = smul.addr %s177, 8
          %s179 = scalar_lea.vmem [#allocation2], %s178
          %s180 = smul.u32 2, %s26
          %s182 = ssub.s32 128, 128
          %183 = vsyncadd %s176, %s182
          %s184 = smul.addr %s27, 2
          %s185 = sadd.s32 %s180, %s184
          %s186 = smul.addr %s25, 2
          %s187 = sadd.s32 %s185, %s186
          %s188 = smul.addr %s187, 64
          %s189 = scalar_lea.hbm %s0, %s188
          %s191 = sshll.u32 %s179, 4
          %s192 = int_to_ptr.vmem [resolvable:$true] %s191
          %194 = dma.hbm_to_vmem [thread:$0]  %s189, 128, %s192, %s176
        $region20: #{tpu_custom_call.1} parent=15 // pred_fallthru
          _
        // Predicated region
        $region21: #{tpu_custom_call.1} parent=15 // pred_check
          %p195 = pneg %p89
        $region22: #{tpu_custom_call.1} parent=15 // pred_check_branch
          %197 = sbr.rel (%p195) target = $region24
        $region23: #{tpu_custom_call.1} parent=15 // pred_region
          %s198 = sand.u32 %s18, 1
          %s199 = scalar_lea.sflag [#allocation6], %s198
          %s200 = sand.u32 %s79, 1
          %s201 = smul.addr %s200, 2
          %s202 = scalar_lea.vmem [#allocation5], %s201
          %s203 = smul.u32 2, %s26
          %s205 = ssub.s32 32, 32
          %206 = vsyncadd %s199, %s205
          %s207 = smul.addr %s25, 2
          %s208 = sadd.s32 %s203, %s207
          %s209 = smul.addr %s208, 16
          %s210 = scalar_lea.hbm %s1, %s209
          %s212 = sshll.u32 %s202, 4
          %s213 = int_to_ptr.vmem [resolvable:$true] %s212
          %215 = dma.hbm_to_vmem [thread:$0]  %s210, 32, %s213, %s199
        $region24: #{tpu_custom_call.1} parent=15 // pred_fallthru
          _
        // Predicated region
        $region25: #{tpu_custom_call.1} parent=15 // pred_check
          %p216 = pneg %p117
        $region26: #{tpu_custom_call.1} parent=15 // pred_check_branch
          %218 = sbr.rel (%p216) target = $region28
        $region27: #{tpu_custom_call.1} parent=15 // pred_region
          %s219 = sand.u32 %s18, 1
          %s220 = scalar_lea.sflag [#allocation6], %s219
          %s221 = sand.u32 %s107, 1
          %s222 = smul.addr %s221, 2
          %s223 = scalar_lea.vmem [#allocation7], %s222
          %s224 = smul.u32 2, %s26
          %s226 = ssub.s32 32, 32
          %227 = vsyncadd %s220, %s226
          %s228 = smul.addr %s25, 2
          %s229 = sadd.s32 %s224, %s228
          %s230 = smul.addr %s229, 16
          %s231 = scalar_lea.hbm %s2, %s230
          %s233 = sshll.u32 %s223, 4
          %s234 = int_to_ptr.vmem [resolvable:$true] %s233
          %236 = dma.hbm_to_vmem [thread:$0]  %s231, 32, %s234, %s220
        $region28: #{tpu_custom_call.1} parent=15 // pred_fallthru
          _
      $region16: #{tpu_custom_call.1} parent=5 // pred_fallthru
        _
      %p237 = scmp.le.s32.totalorder 1, %s18
      %p238 = scmp.lt.s32.totalorder %s18, 3
      %p239 = pnand %p237, %p238
      %p240 = pneg %p239
      // Predicated region
      $region29: #{tpu_custom_call.1} parent=5 // pred_check
        _
      $region30: #{tpu_custom_call.1} parent=5 // pred_check_branch
        %242 = sbr.rel (%p239) target = $region32
      $region31: #{tpu_custom_call.1} parent=5 // pred_region
        %s243 = ssub.s32 %s18, 1
        %s244 = sand.u32 %s54, 1
        %s245 = scalar_lea.sflag [#allocation3], %s244
        %s246 = sand.u32 %s54, 1
        %s247 = smul.addr %s246, 8
        %s248 = scalar_lea.vmem [#allocation2], %s247
        // Predicated region
        $region33: #{tpu_custom_call.1} parent=31 // pred_check
          %p249 = pneg %p67
        $region34: #{tpu_custom_call.1} parent=31 // pred_check_branch
          %251 = sbr.rel (%p249) target = $region36
        $region35: #{tpu_custom_call.1} parent=31 // pred_region
          %252 = dma.done %s245, 128
        $region36: #{tpu_custom_call.1} parent=31 // pred_fallthru
          _
        %s253 = sand.u32 %s23, 1
        %s254 = scalar_lea.sflag [#allocation6], %s253
        %s255 = sand.u32 %s82, 1
        %s256 = smul.addr %s255, 2
        %s257 = scalar_lea.vmem [#allocation5], %s256
        // Predicated region
        $region37: #{tpu_custom_call.1} parent=31 // pred_check
          %p258 = pneg %p95
        $region38: #{tpu_custom_call.1} parent=31 // pred_check_branch
          %260 = sbr.rel (%p258) target = $region40
        $region39: #{tpu_custom_call.1} parent=31 // pred_region
          %261 = dma.done %s254, 32
        $region40: #{tpu_custom_call.1} parent=31 // pred_fallthru
          _
        %s262 = sand.u32 %s23, 1
        %s263 = scalar_lea.sflag [#allocation6], %s262
        %s264 = sand.u32 %s110, 1
        %s265 = smul.addr %s264, 2
        %s266 = scalar_lea.vmem [#allocation7], %s265
        // Predicated region
        $region41: #{tpu_custom_call.1} parent=31 // pred_check
          %p267 = pneg %p123
        $region42: #{tpu_custom_call.1} parent=31 // pred_check_branch
          %269 = sbr.rel (%p267) target = $region44
        $region43: #{tpu_custom_call.1} parent=31 // pred_region
          %270 = dma.done %s263, 32
        $region44: #{tpu_custom_call.1} parent=31 // pred_fallthru
          _
        %s271 = sand.u32 %s54, 1
        %s272 = scalar_lea.sflag [#allocation3], %s271
        %s273 = sand.u32 %s54, 1
        %s274 = smul.addr %s273, 8
        %s275 = scalar_lea.vmem [#allocation2], %s274
        %p276 = pneg %p67
        %p277 = pneg %p64
        %s278 = sand.u32 %s23, 1
        %s279 = scalar_lea.sflag [#allocation6], %s278
        %s280 = sand.u32 %s82, 1
        %s281 = smul.addr %s280, 2
        %s282 = scalar_lea.vmem [#allocation5], %s281
        %p283 = pneg %p95
        %p284 = pneg %p92
        %s285 = sand.u32 %s23, 1
        %s286 = scalar_lea.sflag [#allocation6], %s285
        %s287 = sand.u32 %s110, 1
        %s288 = smul.addr %s287, 2
        %s289 = scalar_lea.vmem [#allocation7], %s288
        %p290 = pneg %p123
        %p291 = pneg %p120
        %p292 = pneg %p153
        %p293 = pneg %p150
        %s294 = sand.u32 %s140, 1
        %s295 = scalar_lea.sflag [#allocation4], %s294
        %s296 = sand.u32 %s140, 1
        %s297 = smul.addr %s296, 8
        %s298 = scalar_lea.vmem [#allocation8], %s297
        %s299 = smul.u32 2, %s29
        %s300 = smul.u32 2, %s29
        %s301 = smul.u32 2, %s29
        %s302 = smul.u32 2, %s29
        %v303 = vld [vmem:[%s248] sm:$0xff]
        %v304 = vld [vmem:[%s257] sm:$0x3]
        %v306 = vlaneseq
        %v307 = vshrl.u32 %v306, 7
        %v308 = vsub.s32 0, %v307
        %v309 = vrot.slane %v304, %v308
        %v310 = vlaneseq
        %v311 = vshrl.u32 %v310, 7
        %v312 = vsub.s32 1, %v311
        %v313 = vrot.slane %v304, %v312
        %v314 = vcombine.low %v309, %v313
        %v316 = vmul.f32 %v303, %v314
        %v317 = vld [vmem:[%s266] sm:$0x3]
        %v319 = vlaneseq
        %v320 = vshrl.u32 %v319, 7
        %v321 = vsub.s32 0, %v320
        %v322 = vrot.slane %v317, %v321
        %v323 = vlaneseq
        %v324 = vshrl.u32 %v323, 7
        %v325 = vsub.s32 1, %v324
        %v326 = vrot.slane %v317, %v325
        %v327 = vcombine.low %v322, %v326
        %v329 = vadd.f32 %v316, %v327
        %330 = vst [vmem:[%s298] sm:$0xff] %v329
        %s331 = sand.u32 %s140, 1
        %s332 = scalar_lea.sflag [#allocation4], %s331
        %s333 = sand.u32 %s140, 1
        %s334 = smul.addr %s333, 8
        %s335 = scalar_lea.vmem [#allocation8], %s334
        // Predicated region
        $region45: #{tpu_custom_call.1} parent=31 // pred_check
          %p336 = pneg %p150
        $region46: #{tpu_custom_call.1} parent=31 // pred_check_branch
          %338 = sbr.rel (%p336) target = $region48
        $region47: #{tpu_custom_call.1} parent=31 // pred_region
          %s339 = smul.u32 2, %s29
          %s341 = ssub.s32 128, 128
          %342 = vsyncadd %s332, %s341
          %s343 = smul.addr %s30, 2
          %s344 = sadd.s32 %s339, %s343
          %s345 = smul.addr %s28, 2
          %s346 = sadd.s32 %s344, %s345
          %s347 = smul.addr %s346, 64
          %s348 = scalar_lea.hbm %s3, %s347
          %s350 = sshll.u32 %s335, 4
          %s351 = int_to_ptr.vmem [resolvable:$true] %s350
          %353 = dma.vmem_to_hbm [thread:$0]  %s351, 128, %s348, %s332
        $region48: #{tpu_custom_call.1} parent=31 // pred_fallthru
          _
      $region32: #{tpu_custom_call.1} parent=5 // pred_fallthru
        _
      %p354 = scmp.le.s32.totalorder 2, %s18
      // Predicated region
      $region49: #{tpu_custom_call.1} parent=5 // pred_check
        %p355 = pneg %p354
      $region50: #{tpu_custom_call.1} parent=5 // pred_check_branch
        %357 = sbr.rel (%p355) target = $region52
      $region51: #{tpu_custom_call.1} parent=5 // pred_region
        %s358 = ssub.s32 %s18, 2
        // Predicated region
        $region53: #{tpu_custom_call.1} parent=51 // pred_check
          %p359 = pneg %p156
        $region54: #{tpu_custom_call.1} parent=51 // pred_check_branch
          %361 = sbr.rel (%p359) target = $region56
        $region55: #{tpu_custom_call.1} parent=51 // pred_region
          %s362 = sand.u32 %s141, 1
          %s363 = scalar_lea.sflag [#allocation4], %s362
          %s364 = sand.u32 %s141, 1
          %s365 = smul.addr %s364, 8
          %s366 = scalar_lea.vmem [#allocation8], %s365
          %367 = dma.done %s363, 128
        $region56: #{tpu_custom_call.1} parent=51 // pred_fallthru
          _
      $region52: #{tpu_custom_call.1} parent=5 // pred_fallthru
        _
    $region6: #{tpu_custom_call.1} parent=1 // loop_footer
      %s22 = sadd.s32 1, %s18
    $region7: #{tpu_custom_call.1} parent=1 // loop_footer_branch
      %17 = sbr.rel target = $region3
    $region8: #{tpu_custom_call.1} parent=1 // loop_exit
      _
    %368 = vsyncpa [#allocation3], 1
    %s369 = scalar_lea.sflag [#allocation3], 1
    %370 = vsyncpa %s369, 1
    %371 = vsyncpa [#allocation6], 1
    %s372 = scalar_lea.sflag [#allocation6], 1
    %373 = vsyncpa %s372, 1
    %374 = vsyncpa [#allocation4], 1
    %s375 = scalar_lea.sflag [#allocation4], 1
    %376 = vsyncpa %s375, 1

</llo_original>
